<compile_context>
chip_gen: v7x
topology: tpu7x:2x2x1
jax: 0.10.0
libtpu: 0.0.40
codegen_flags: <defaults>
</compile_context>

<pallas_src>
import jax
import jax.numpy as jnp
from jax.experimental import pallas as pl
from jax.experimental.pallas import tpu as pltpu


def _se_kernel(x_ref, w1_ref, w2_ref, o_ref):
    # x_ref/o_ref: (Bt, C, HW); w1_ref: (C, Cr); w2_ref: (Cr, C)
    # Squeeze: global average pool over the spatial (lane) axis.  Accumulate in
    # f32 for the reduction only -- do NOT materialize an f32 copy of the tile.
    y = jnp.mean(x_ref[...], axis=-1, dtype=jnp.float32)                # (Bt, C)

    # Excitation MLP: Linear -> ReLU -> Linear -> Sigmoid, f32 throughout.
    h = jnp.dot(y, w1_ref[...].astype(jnp.float32),
                preferred_element_type=jnp.float32)                     # (Bt, Cr)
    h = jnp.maximum(h, 0.0)
    s = jnp.dot(h, w2_ref[...].astype(jnp.float32),
                preferred_element_type=jnp.float32)                     # (Bt, C)
    s = jax.nn.sigmoid(s)                                               # EUP

    # Excite: per-channel scale broadcast along the spatial axis, computed in
    # the input's native dtype on the VPU (no extra f32 round trip of the tile).
    o_ref[...] = x_ref[...] * s[:, :, None].astype(o_ref.dtype)


def _pick_batch_tile(B, C, HW, itemsize, target_bytes=4 << 20):
    """Largest divisor of B whose (Bt, C, HW) block stays <= target_bytes.

    Only forces >= 2 grid iterations (Bt <= B//2, so both v7x TensorCores get
    work) when the full tensor is big enough that splitting pays for the extra
    per-step overhead; for tiny inputs a single grid step is strictly cheaper.
    """
    per_batch = C * HW * itemsize
    cap = max(1, target_bytes // per_batch)
    if B >= 2 and B * per_batch >= (8 << 20):
        cap = min(cap, max(1, B // 2))
    bt = 1
    for d in range(1, B + 1):
        if B % d == 0 and d <= cap:
            bt = d
    return bt


def se_layer(x_nchw, w1, w2):
    """x_nchw: (B, C, H, W). w1: (C, C//r). w2: (C//r, C). Returns (B, C, H, W).

    Weights are stored as (in_features, out_features), i.e. transposed vs torch
    nn.Linear.weight; se_layer(x, W1_t, W2_t) == SELayer.forward(x).
    """
    B, C, H, W = x_nchw.shape
    HW = H * W
    Cr = w1.shape[1]
    x = x_nchw.reshape(B, C, HW)
    itemsize = jnp.dtype(x.dtype).itemsize

    Bt = _pick_batch_tile(B, C, HW, itemsize)
    grid = (B // Bt,)

    # VMEM budget: double-buffered x block + double-buffered output block,
    # resident weights, and small f32 temporaries; clamp to a range safe on all
    # chips (v7x has only 64 MiB physical / 32 MiB default scoped VMEM).
    block_bytes = Bt * C * HW * itemsize
    w_bytes = (C * Cr + Cr * C) * jnp.dtype(w1.dtype).itemsize
    vmem_budget = 4 * block_bytes + 2 * w_bytes + (4 << 20)
    vmem_budget = int(min(max(vmem_budget, 16 << 20), 48 << 20))
    # TODO(synk): for very large spatial maps (Bt=1 block > ~10 MiB) a two-pass
    # spatially-tiled variant would be needed; not required at these shapes.

    # This op is HBM-bandwidth bound: one read + one write of x, tiny weights.
    cost = pl.CostEstimate(
        flops=2 * B * C * HW + 4 * B * C * Cr,
        transcendentals=B * C,  # sigmoid
        bytes_accessed=2 * B * C * HW * itemsize + 2 * w_bytes,
    )

    out = pl.pallas_call(
        _se_kernel,
        out_shape=jax.ShapeDtypeStruct((B, C, HW), x_nchw.dtype),
        grid_spec=pltpu.PrefetchScalarGridSpec(
            num_scalar_prefetch=0,
            grid=grid,
            in_specs=[
                pl.BlockSpec((Bt, C, HW), lambda b: (b, 0, 0)),
                pl.BlockSpec((C, Cr), lambda b: (0, 0)),
                pl.BlockSpec((Cr, C), lambda b: (0, 0)),
            ],
            out_specs=pl.BlockSpec((Bt, C, HW), lambda b: (b, 0, 0)),
        ),
        compiler_params=pltpu.CompilerParams(
            dimension_semantics=("parallel",),
            vmem_limit_bytes=vmem_budget,
        ),
        cost_estimate=cost,
    )(x, w1, w2)

    return out.reshape(B, C, H, W)


def _reference(x_nchw, w1, w2):
    y = jnp.mean(x_nchw.astype(jnp.float32), axis=(2, 3))               # (B, C)
    h = jnp.maximum(y @ w1.astype(jnp.float32), 0.0)
    s = jax.nn.sigmoid(h @ w2.astype(jnp.float32))
    return (x_nchw.astype(jnp.float32) * s[:, :, None, None]).astype(x_nchw.dtype)


if __name__ == "__main__":
    # Shapes consistent with SELayer(channel=64, reduction=16): hidden = 4.
    B, C, H, W = 2, 64, 16, 16
    reduction = 16
    Cr = C // reduction

    key = jax.random.PRNGKey(0)
    kx, k1, k2 = jax.random.split(key, 3)

    x = jax.random.normal(kx, (B, C, H, W), dtype=jnp.float32)
    # Deterministic init mimicking nn.Linear's kaiming-uniform fan-in bound.
    bound1 = 1.0 / jnp.sqrt(C)
    bound2 = 1.0 / jnp.sqrt(Cr)
    # Stored as (in_features, out_features), i.e. transposed vs torch.
    w1 = jax.random.uniform(k1, (C, Cr), jnp.float32, -bound1, bound1)
    w2 = jax.random.uniform(k2, (Cr, C), jnp.float32, -bound2, bound2)

    out = se_layer(x, w1, w2)
    jax.block_until_ready(out)

    ref = _reference(x, w1, w2)
    assert out.shape == ref.shape, "shape mismatch vs reference"
    assert jnp.allclose(out, ref, atol=1e-5, rtol=1e-5), "mismatch vs reference"

    print("KERNEL_OK")
</pallas_src>

<mosaic_0001>
module attributes {stable_mosaic.version = 11 : i64} {
  func.func @_se_kernel(%arg0: i32, %arg1: memref<2x64x256xf32, #tpu.memory_space<vmem>>, %arg2: memref<64x4xf32, #tpu.memory_space<vmem>>, %arg3: memref<4x64xf32, #tpu.memory_space<vmem>>, %arg4: memref<2x64x256xf32, #tpu.memory_space<vmem>>) attributes {dimension_semantics = [#tpu.dimension_semantics<parallel>], iteration_bounds = array<i64: 1>, scalar_prefetch = 0 : i64, scratch_operands = 0 : i64, tpu.core_type = #tpu.core_type<tc>, window_params = [{transform_indices = @transform_0, window_bounds = array<i64: 2, 64, 256>}, {pipeline_mode = #tpu.pipeline_mode<synchronous>, transform_indices = @transform_1, window_bounds = array<i64: 64, 4>}, {pipeline_mode = #tpu.pipeline_mode<synchronous>, transform_indices = @transform_2, window_bounds = array<i64: 4, 64>}, {transform_indices = @transform_3, window_bounds = array<i64: 2, 64, 256>}]} {
    %c0 = arith.constant 0 : index
    %c0_0 = arith.constant 0 : index
    %c0_1 = arith.constant 0 : index
    %0 = vector.load %arg1[%c0, %c0_0, %c0_1] : memref<2x64x256xf32, #tpu.memory_space<vmem>>, vector<2x64x256xf32>
    %cst = arith.constant dense<0.000000e+00> : vector<2x64xf32>
    %1 = vector.multi_reduction <add>, %0, %cst [2] : vector<2x64x256xf32> to vector<2x64xf32>
    %cst_2 = arith.constant 2.560000e+02 : f32
    %2 = vector.broadcast %cst_2 : f32 to vector<2x64xf32>
    %3 = arith.divf %1, %2 : vector<2x64xf32>
    %c0_3 = arith.constant 0 : index
    %c0_4 = arith.constant 0 : index
    %4 = vector.load %arg2[%c0_3, %c0_4] : memref<64x4xf32, #tpu.memory_space<vmem>>, vector<64x4xf32>
    %cst_5 = arith.constant dense<0.000000e+00> : vector<2x4xf32>
    %5 = tpu.matmul %3, %4, %cst_5 {dimension_numbers = #tpu.dot_dimension_numbers<[1], [0], [0], [1], [0, 0, 1, 1], [], []>} : vector<2x64xf32>, vector<64x4xf32>, vector<2x4xf32> -> vector<2x4xf32>
    %cst_6 = arith.constant 0.000000e+00 : f32
    %6 = vector.broadcast %cst_6 : f32 to vector<2x4xf32>
    %7 = arith.maximumf %5, %6 : vector<2x4xf32>
    %c0_7 = arith.constant 0 : index
    %c0_8 = arith.constant 0 : index
    %8 = vector.load %arg3[%c0_7, %c0_8] : memref<4x64xf32, #tpu.memory_space<vmem>>, vector<4x64xf32>
    %cst_9 = arith.constant dense<0.000000e+00> : vector<2x64xf32>
    %9 = tpu.matmul %7, %8, %cst_9 {dimension_numbers = #tpu.dot_dimension_numbers<[1], [0], [0], [1], [0, 0, 1, 1], [], []>} : vector<2x4xf32>, vector<4x64xf32>, vector<2x64xf32> -> vector<2x64xf32>
    %10 = arith.negf %9 : vector<2x64xf32>
    %11 = math.exp %10 : vector<2x64xf32>
    %cst_10 = arith.constant 1.000000e+00 : f32
    %12 = vector.broadcast %cst_10 : f32 to vector<2x64xf32>
    %13 = arith.addf %12, %11 : vector<2x64xf32>
    %14 = arith.divf %12, %13 : vector<2x64xf32>
    %c0_11 = arith.constant 0 : index
    %c0_12 = arith.constant 0 : index
    %c0_13 = arith.constant 0 : index
    %15 = vector.load %arg1[%c0_11, %c0_12, %c0_13] : memref<2x64x256xf32, #tpu.memory_space<vmem>>, vector<2x64x256xf32>
    %16 = vector.shape_cast %14 : vector<2x64xf32> to vector<2x64x1xf32>
    %17 = vector.broadcast %16 : vector<2x64x1xf32> to vector<2x64x256xf32>
    %18 = arith.mulf %15, %17 : vector<2x64x256xf32>
    %c0_14 = arith.constant 0 : index
    %c0_15 = arith.constant 0 : index
    %c0_16 = arith.constant 0 : index
    %19 = vector.load %arg4[%c0_14, %c0_15, %c0_16] : memref<2x64x256xf32, #tpu.memory_space<vmem>>, vector<2x64x256xf32>
    tpu.vector_store %arg4[%c0_14, %c0_15, %c0_16], %18 {strides = array<i32>} : memref<2x64x256xf32, #tpu.memory_space<vmem>>, vector<2x64x256xf32>,
    return
  }
  func.func @transform_0(%arg0: i32) -> (i32, i32, i32) {
    %c0_i32 = arith.constant 0 : i32
    %c0_i32_0 = arith.constant 0 : i32
    %c0_i32_1 = arith.constant 0 : i32
    return %arg0, %c0_i32, %c0_i32_0 : i32, i32, i32
  }
  func.func @transform_1(%arg0: i32) -> (i32, i32) {
    %c0_i32 = arith.constant 0 : i32
    %c0_i32_0 = arith.constant 0 : i32
    %c0_i32_1 = arith.constant 0 : i32
    return %c0_i32, %c0_i32_0 : i32, i32
  }
  func.func @transform_2(%arg0: i32) -> (i32, i32) {
    %c0_i32 = arith.constant 0 : i32
    %c0_i32_0 = arith.constant 0 : i32
    %c0_i32_1 = arith.constant 0 : i32
    return %c0_i32, %c0_i32_0 : i32, i32
  }
  func.func @transform_3(%arg0: i32) -> (i32, i32, i32) {
    %c0_i32 = arith.constant 0 : i32
    %c0_i32_0 = arith.constant 0 : i32
    %c0_i32_1 = arith.constant 0 : i32
    return %arg0, %c0_i32, %c0_i32_0 : i32, i32, i32
  }
}

</mosaic_0001>

<llo_original>
// kernel: tpu_custom_call.1
$region0: #{tpu_custom_call.1}
  #allocation0 [shape = 'u32[]', space=smem, size = 0x4, offset = 0x4, fixed_abs, tag = 'smem constant byte address 0x4 - core index']
  #allocation1 [shape = 'u32[144,128]{1,0:T(1,128)}', space=vmem, size = 0x12000, scoped, tag = 'internal scratch']
  %s0 = inlined_call_operand.hbm [shape: f32[2,64,256], index: 0, kind: input, shape index: {}]
  %s1 = inlined_call_operand.vmem [shape: f32[64,4], index: 1, kind: input, shape index: {}]
  %s2 = inlined_call_operand.vmem [shape: f32[4,64], index: 2, kind: input, shape index: {}]
  %s3 = inlined_call_operand.hbm [shape: f32[2,64,256], index: 3, kind: output, shape index: {}]
  %s4 = sld [smem:[#allocation0]]
  $region26: #{tpu_custom_call.1} parent=0
    _
  %s6 = ssub.s32 1, %s4
  %s7 = scalar_select 0, %s6, %s4
  $region1: #{tpu_custom_call.1} parent=0
    #allocation2 [shape = 'u8[131072]{0}', space=vmem, size = 0x20000, scoped, tag = 'input window, operand 0, single buffered']
    #allocation3 [shape = 's32[1]{0}', space=sflag, size = 0x4, scoped, tag = 'scoped memory for tpu_custom_call.1']
    #allocation4 [shape = 's32[1]{0}', space=sflag, size = 0x4, scoped, tag = 'scoped memory for tpu_custom_call.1']
    #allocation5 [shape = 'u8[131072]{0}', space=vmem, size = 0x20000, scoped, tag = 'output window, operand 0, single buffered']
    %8 = vsyncpa [#allocation3], 0
    %9 = vsyncpa [#allocation4], 0
    // Predicated region
    $region2: #{tpu_custom_call.1} parent=1 // pred_check
      _
    $region3: #{tpu_custom_call.1} parent=1 // pred_check_branch
      %11 = sbr.rel (0) target = $region5
    $region4: #{tpu_custom_call.1} parent=1 // pred_region
      %s13 = ssub.s32 4096, 4096
      %14 = vsyncadd [#allocation3], %s13
      %s15 = sshll.u32 [#allocation2], 4
      %s16 = int_to_ptr.vmem [resolvable:$true] %s15
      %21 = dma.hbm_to_vmem [thread:$0]  %s0, 4096, %s16, [#allocation3], 256, 256, 16
    $region5: #{tpu_custom_call.1} parent=1 // pred_fallthru
      _
    // Predicated region
    $region6: #{tpu_custom_call.1} parent=1 // pred_check
      _
    $region7: #{tpu_custom_call.1} parent=1 // pred_check_branch
      %23 = sbr.rel (0) target = $region9
    $region8: #{tpu_custom_call.1} parent=1 // pred_region
      _
    $region9: #{tpu_custom_call.1} parent=1 // pred_fallthru
      _
    // Predicated region
    $region10: #{tpu_custom_call.1} parent=1 // pred_check
      _
    $region11: #{tpu_custom_call.1} parent=1 // pred_check_branch
      %25 = sbr.rel (0) target = $region13
    $region12: #{tpu_custom_call.1} parent=1 // pred_region
      _
    $region13: #{tpu_custom_call.1} parent=1 // pred_fallthru
      _
    // Predicated region
    $region14: #{tpu_custom_call.1} parent=1 // pred_check
      _
    $region15: #{tpu_custom_call.1} parent=1 // pred_check_branch
      %27 = sbr.rel (0) target = $region17
    $region16: #{tpu_custom_call.1} parent=1 // pred_region
      %28 = dma.done [#allocation3], 4096
    $region17: #{tpu_custom_call.1} parent=1 // pred_fallthru
      _
    %v29 = vld [vmem:[#allocation2] sm:$0xff]
    %v30 = vld [vmem:[#allocation2 + $0x8] sm:$0xff]
    %v31 = vld [vmem:[#allocation2 + $0x10] sm:$0xff]
    %v32 = vld [vmem:[#allocation2 + $0x18] sm:$0xff]
    %v33 = vld [vmem:[#allocation2 + $0x20] sm:$0xff]
    %v34 = vld [vmem:[#allocation2 + $0x28] sm:$0xff]
    %v35 = vld [vmem:[#allocation2 + $0x30] sm:$0xff]
    %v36 = vld [vmem:[#allocation2 + $0x38] sm:$0xff]
    %v37 = vld [vmem:[#allocation2 + $0x40] sm:$0xff]
    %v38 = vld [vmem:[#allocation2 + $0x48] sm:$0xff]
    %v39 = vld [vmem:[#allocation2 + $0x50] sm:$0xff]
    %v40 = vld [vmem:[#allocation2 + $0x58] sm:$0xff]
    %v41 = vld [vmem:[#allocation2 + $0x60] sm:$0xff]
    %v42 = vld [vmem:[#allocation2 + $0x68] sm:$0xff]
    %v43 = vld [vmem:[#allocation2 + $0x70] sm:$0xff]
    %v44 = vld [vmem:[#allocation2 + $0x78] sm:$0xff]
    %v45 = vld [vmem:[#allocation2 + $0x80] sm:$0xff]
    %v46 = vld [vmem:[#allocation2 + $0x88] sm:$0xff]
    %v47 = vld [vmem:[#allocation2 + $0x90] sm:$0xff]
    %v48 = vld [vmem:[#allocation2 + $0x98] sm:$0xff]
    %v49 = vld [vmem:[#allocation2 + $0xa0] sm:$0xff]
    %v50 = vld [vmem:[#allocation2 + $0xa8] sm:$0xff]
    %v51 = vld [vmem:[#allocation2 + $0xb0] sm:$0xff]
    %v52 = vld [vmem:[#allocation2 + $0xb8] sm:$0xff]
    %v53 = vld [vmem:[#allocation2 + $0xc0] sm:$0xff]
    %v54 = vld [vmem:[#allocation2 + $0xc8] sm:$0xff]
    %v55 = vld [vmem:[#allocation2 + $0xd0] sm:$0xff]
    %v56 = vld [vmem:[#allocation2 + $0xd8] sm:$0xff]
    %v57 = vld [vmem:[#allocation2 + $0xe0] sm:$0xff]
    %v58 = vld [vmem:[#allocation2 + $0xe8] sm:$0xff]
    %v59 = vld [vmem:[#allocation2 + $0xf0] sm:$0xff]
    %v60 = vld [vmem:[#allocation2 + $0xf8] sm:$0xff]
    %v61 = vadd.f32 %v29, %v30
    %62 = vadd.xlane.f32.xlu0 %v61
    %v63 = vpop.xlane.xlu0 %62
    %v64 = vadd.f32 %v31, %v32
    %65 = vadd.xlane.f32.xlu0 %v64
    %v66 = vpop.xlane.xlu0 %65
    %v67 = vadd.f32 %v33, %v34
    %68 = vadd.xlane.f32.xlu0 %v67
    %v69 = vpop.xlane.xlu0 %68
    %v70 = vadd.f32 %v35, %v36
    %71 = vadd.xlane.f32.xlu0 %v70
    %v72 = vpop.xlane.xlu0 %71
    %v73 = vadd.f32 %v37, %v38
    %74 = vadd.xlane.f32.xlu0 %v73
    %v75 = vpop.xlane.xlu0 %74
    %v76 = vadd.f32 %v39, %v40
    %77 = vadd.xlane.f32.xlu0 %v76
    %v78 = vpop.xlane.xlu0 %77
    %v79 = vadd.f32 %v41, %v42
    %80 = vadd.xlane.f32.xlu0 %v79
    %v81 = vpop.xlane.xlu0 %80
    %v82 = vadd.f32 %v43, %v44
    %83 = vadd.xlane.f32.xlu0 %v82
    %v84 = vpop.xlane.xlu0 %83
    %v85 = vadd.f32 %v45, %v46
    %86 = vadd.xlane.f32.xlu0 %v85
    %v87 = vpop.xlane.xlu0 %86
    %v88 = vadd.f32 %v47, %v48
    %89 = vadd.xlane.f32.xlu0 %v88
    %v90 = vpop.xlane.xlu0 %89
    %v91 = vadd.f32 %v49, %v50
    %92 = vadd.xlane.f32.xlu0 %v91
    %v93 = vpop.xlane.xlu0 %92
    %v94 = vadd.f32 %v51, %v52
    %95 = vadd.xlane.f32.xlu0 %v94
    %v96 = vpop.xlane.xlu0 %95
    %v97 = vadd.f32 %v53, %v54
    %98 = vadd.xlane.f32.xlu0 %v97
    %v99 = vpop.xlane.xlu0 %98
    %v100 = vadd.f32 %v55, %v56
    %101 = vadd.xlane.f32.xlu0 %v100
    %v102 = vpop.xlane.xlu0 %101
    %v103 = vadd.f32 %v57, %v58
    %104 = vadd.xlane.f32.xlu0 %v103
    %v105 = vpop.xlane.xlu0 %104
    %v106 = vadd.f32 %v59, %v60
    %107 = vadd.xlane.f32.xlu0 %v106
    %v108 = vpop.xlane.xlu0 %107
    %v109 = vrcp.pop 256.0
    %v110 = vmul.f32 %v63, %v109
    %v111 = vmul.f32 %v66, %v109
    %v112 = vmul.f32 %v69, %v109
    %v113 = vmul.f32 %v72, %v109
    %v114 = vmul.f32 %v75, %v109
    %v115 = vmul.f32 %v78, %v109
    %v116 = vmul.f32 %v81, %v109
    %v117 = vmul.f32 %v84, %v109
    %v118 = vmul.f32 %v87, %v109
    %v119 = vmul.f32 %v90, %v109
    %v120 = vmul.f32 %v93, %v109
    %v121 = vmul.f32 %v96, %v109
    %v122 = vmul.f32 %v99, %v109
    %v123 = vmul.f32 %v102, %v109
    %v124 = vmul.f32 %v105, %v109
    %v125 = vmul.f32 %v108, %v109
    %v126 = vld [vmem:[%s1] sm:$0xff]
    %v127 = vld [vmem:[%s1 + $0x8] sm:$0xff]
    %v128 = vld [vmem:[%s1 + $0x10] sm:$0xff]
    %v129 = vld [vmem:[%s1 + $0x18] sm:$0xff]
    %v130 = vld [vmem:[%s1 + $0x20] sm:$0xff]
    %v131 = vld [vmem:[%s1 + $0x28] sm:$0xff]
    %v132 = vld [vmem:[%s1 + $0x30] sm:$0xff]
    %v133 = vld [vmem:[%s1 + $0x38] sm:$0xff]
    %v150 = vlaneseq
    %v151 = vand.u32 %v150, 127
    %v152 = vlaneseq
    %v153 = vshrl.u32 %v152, 7
    %v154 = vsub.s32 %v151, %v153
    %v155 = vrot.slane %v110, %v154
    %v156 = vadd.s32 %v151, 4294967288
    %v157 = vlaneseq
    %v158 = vshrl.u32 %v157, 7
    %v159 = vsub.s32 %v156, %v158
    %v160 = vrot.slane %v111, %v159
    %vm161 = vcmask 130112
    %v162 = vsel %vm161, %v160, %v155
    %v163 = vadd.s32 %v151, 4294967280
    %v164 = vlaneseq
    %v165 = vshrl.u32 %v164, 7
    %v166 = vsub.s32 %v163, %v165
    %v167 = vrot.slane %v112, %v166
    %vm168 = vcmask 195712
    %v169 = vsel %vm168, %v167, %v162
    %v170 = vadd.s32 %v151, 4294967272
    %v171 = vlaneseq
    %v172 = vshrl.u32 %v171, 7
    %v173 = vsub.s32 %v170, %v172
    %v174 = vrot.slane %v113, %v173
    %vm175 = vcmask 261312
    %v176 = vsel %vm175, %v174, %v169
    %v177 = vadd.s32 %v151, 4294967264
    %v178 = vlaneseq
    %v179 = vshrl.u32 %v178, 7
    %v180 = vsub.s32 %v177, %v179
    %v181 = vrot.slane %v114, %v180
    %vm182 = vcmask 326912
    %v183 = vsel %vm182, %v181, %v176
    %v184 = vadd.s32 %v151, 4294967256
    %v185 = vlaneseq
    %v186 = vshrl.u32 %v185, 7
    %v187 = vsub.s32 %v184, %v186
    %v188 = vrot.slane %v115, %v187
    %vm189 = vcmask 392512
    %v190 = vsel %vm189, %v188, %v183
    %v191 = vadd.s32 %v151, 4294967248
    %v192 = vlaneseq
    %v193 = vshrl.u32 %v192, 7
    %v194 = vsub.s32 %v191, %v193
    %v195 = vrot.slane %v116, %v194
    %vm196 = vcmask 458112
    %v197 = vsel %vm196, %v195, %v190
    %v198 = vadd.s32 %v151, 4294967240
    %v199 = vlaneseq
    %v200 = vshrl.u32 %v199, 7
    %v201 = vsub.s32 %v198, %v200
    %v202 = vrot.slane %v117, %v201
    %vm203 = vcmask 523712
    %v204 = vsel %vm203, %v202, %v197
    %v205 = vlaneseq
    %v206 = vshrl.u32 %v205, 7
    %v207 = vsub.s32 %v151, %v206
    %v208 = vrot.slane %v118, %v207
    %v209 = vlaneseq
    %v210 = vshrl.u32 %v209, 7
    %v211 = vsub.s32 %v156, %v210
    %v212 = vrot.slane %v119, %v211
    %v213 = vsel %vm161, %v212, %v208
    %v214 = vlaneseq
    %v215 = vshrl.u32 %v214, 7
    %v216 = vsub.s32 %v163, %v215
    %v217 = vrot.slane %v120, %v216
    %v218 = vsel %vm168, %v217, %v213
    %v219 = vlaneseq
    %v220 = vshrl.u32 %v219, 7
    %v221 = vsub.s32 %v170, %v220
    %v222 = vrot.slane %v121, %v221
    %v223 = vsel %vm175, %v222, %v218
    %v224 = vlaneseq
    %v225 = vshrl.u32 %v224, 7
    %v226 = vsub.s32 %v177, %v225
    %v227 = vrot.slane %v122, %v226
    %v228 = vsel %vm182, %v227, %v223
    %v229 = vlaneseq
    %v230 = vshrl.u32 %v229, 7
    %v231 = vsub.s32 %v184, %v230
    %v232 = vrot.slane %v123, %v231
    %v233 = vsel %vm189, %v232, %v228
    %v234 = vlaneseq
    %v235 = vshrl.u32 %v234, 7
    %v236 = vsub.s32 %v191, %v235
    %v237 = vrot.slane %v124, %v236
    %v238 = vsel %vm196, %v237, %v233
    %v239 = vlaneseq
    %v240 = vshrl.u32 %v239, 7
    %v241 = vsub.s32 %v198, %v240
    %v242 = vrot.slane %v125, %v241
    %v243 = vsel %vm203, %v242, %v238
    %vm244 = vcmask 1041409
    %v245 = vsel %vm244, %v243, %v204
    %vm246 = vcmask 523264
    %v247 = vsel %vm246, %v245, 0
    %249 = vmatprep.subr.mxu0 0.0
    %250 = vmatpush1.msra.mxu0 %v126
    %251 = vmatprep.subr.mxu0 0.0
    %252 = vmatpush1.msra.mxu0 %v127
    %253 = vmatprep.subr.mxu0 0.0
    %254 = vmatpush1.msra.mxu0 %v128
    %255 = vmatprep.subr.mxu0 0.0
    %256 = vmatpush1.msra.mxu0 %v129
    %257 = vmatprep.subr.mxu0 0.0
    %258 = vmatpush1.msra.mxu0 %v130
    %259 = vmatprep.subr.mxu0 0.0
    %260 = vmatpush1.msra.mxu0 %v131
    %261 = vmatprep.subr.mxu0 0.0
    %262 = vmatpush1.msra.mxu0 %v132
    %263 = vmatprep.subr.mxu0 0.0
    %264 = vmatpush1.msra.mxu0 %v133
    %265 = vmatprep.subr.mxu0 0.0
    %266 = vmatpush1.msra.mxu0 0.0
    %267 = vmatprep.subr.mxu0 0.0
    %268 = vmatpush1.msra.mxu0 0.0
    %269 = vmatprep.subr.mxu0 0.0
    %270 = vmatpush1.msra.mxu0 0.0
    %271 = vmatprep.subr.mxu0 0.0
    %272 = vmatpush1.msra.mxu0 0.0
    %273 = vmatprep.subr.mxu0 0.0
    %274 = vmatpush1.msra.mxu0 0.0
    %275 = vmatprep.subr.mxu0 0.0
    %276 = vmatpush1.msra.mxu0 0.0
    %277 = vmatprep.subr.mxu0 0.0
    %278 = vmatpush1.msra.mxu0 0.0
    %279 = vmatprep.subr.mxu0 0.0
    %280 = vmatpush1.msra.mxu0 0.0
    %281 = vmatprep.subr.mxu0 0.0
    %282 = vmatpush1.msra.mxu0 0.0
    %283 = vmatprep.subr.mxu0 0.0
    %284 = vmatpush1.msra.mxu0 0.0
    %285 = vmatprep.subr.mxu0 0.0
    %286 = vmatpush1.msra.mxu0 0.0
    %287 = vmatprep.subr.mxu0 0.0
    %288 = vmatpush1.msra.mxu0 0.0
    %289 = vmatprep.subr.mxu0 0.0
    %290 = vmatpush1.msra.mxu0 0.0
    %291 = vmatprep.subr.mxu0 0.0
    %292 = vmatpush1.msra.mxu0 0.0
    %293 = vmatprep.subr.mxu0 0.0
    %294 = vmatpush1.msra.mxu0 0.0
    %295 = vmatprep.subr.mxu0 0.0
    %296 = vmatpush1.msra.mxu0 0.0
    %297 = vmatprep.subr.mxu0 0.0
    %298 = vmatpush1.msra.mxu0 0.0
    %299 = vmatprep.subr.mxu0 0.0
    %300 = vmatpush1.msra.mxu0 0.0
    %301 = vmatprep.subr.mxu0 0.0
    %302 = vmatpush1.msra.mxu0 0.0
    %303 = vmatprep.subr.mxu0 0.0
    %304 = vmatpush1.msra.mxu0 0.0
    %305 = vmatprep.subr.mxu0 0.0
    %306 = vmatpush1.msra.mxu0 0.0
    %307 = vmatprep.subr.mxu0 0.0
    %308 = vmatpush1.msra.mxu0 0.0
    %309 = vmatprep.subr.mxu0 0.0
    %310 = vmatpush1.msra.mxu0 0.0
    %311 = vmatprep.subr.mxu0 0.0
    %312 = vmatpush1.msra.mxu0 0.0
    %313 = vmatprep.mubr.f32.mxu0 0.0
    %314 = vmatmul.mubr.f32.gmra.mrb[0].mxu0 %v247
    %v315 = vpop.f32.mrb[0].mxu0
    %v316 = vadd.f32 0.0, %v315
    %v317 = vpop.f32.mrb[0].mxu0
    %318 = vdwg.mxu0
    %v319 = vmax.f32 %v316, 0.0
    %v320 = vld [vmem:[%s2] sm:$0xf]
    %vm321 = vcmask 31744
    %v323 = vsel %vm321, %v319, 0
    %vm325 = vcmask 1043456
    %v327 = vsel %vm325, %v320, 0
    %329 = vmatprep.subr.mxu0 0.0
    %330 = vmatpush1.msra.mxu0 %v327
    %331 = vmatprep.subr.mxu0 0.0
    %332 = vmatpush1.msra.mxu0 0.0
    %333 = vmatprep.subr.mxu0 0.0
    %334 = vmatpush1.msra.mxu0 0.0
    %335 = vmatprep.subr.mxu0 0.0
    %336 = vmatpush1.msra.mxu0 0.0
    %337 = vmatprep.subr.mxu0 0.0
    %338 = vmatpush1.msra.mxu0 0.0
    %339 = vmatprep.subr.mxu0 0.0
    %340 = vmatpush1.msra.mxu0 0.0
    %341 = vmatprep.subr.mxu0 0.0
    %342 = vmatpush1.msra.mxu0 0.0
    %343 = vmatprep.subr.mxu0 0.0
    %344 = vmatpush1.msra.mxu0 0.0
    %345 = vmatprep.subr.mxu0 0.0
    %346 = vmatpush1.msra.mxu0 0.0
    %347 = vmatprep.subr.mxu0 0.0
    %348 = vmatpush1.msra.mxu0 0.0
    %349 = vmatprep.subr.mxu0 0.0
    %350 = vmatpush1.msra.mxu0 0.0
    %351 = vmatprep.subr.mxu0 0.0
    %352 = vmatpush1.msra.mxu0 0.0
    %353 = vmatprep.subr.mxu0 0.0
    %354 = vmatpush1.msra.mxu0 0.0
    %355 = vmatprep.subr.mxu0 0.0
    %356 = vmatpush1.msra.mxu0 0.0
    %357 = vmatprep.subr.mxu0 0.0
    %358 = vmatpush1.msra.mxu0 0.0
    %359 = vmatprep.subr.mxu0 0.0
    %360 = vmatpush1.msra.mxu0 0.0
    %361 = vmatprep.subr.mxu0 0.0
    %362 = vmatpush1.msra.mxu0 0.0
    %363 = vmatprep.subr.mxu0 0.0
    %364 = vmatpush1.msra.mxu0 0.0
    %365 = vmatprep.subr.mxu0 0.0
    %366 = vmatpush1.msra.mxu0 0.0
    %367 = vmatprep.subr.mxu0 0.0
    %368 = vmatpush1.msra.mxu0 0.0
    %369 = vmatprep.subr.mxu0 0.0
    %370 = vmatpush1.msra.mxu0 0.0
    %371 = vmatprep.subr.mxu0 0.0
    %372 = vmatpush1.msra.mxu0 0.0
    %373 = vmatprep.subr.mxu0 0.0
    %374 = vmatpush1.msra.mxu0 0.0
    %375 = vmatprep.subr.mxu0 0.0
    %376 = vmatpush1.msra.mxu0 0.0
    %377 = vmatprep.subr.mxu0 0.0
    %378 = vmatpush1.msra.mxu0 0.0
    %379 = vmatprep.subr.mxu0 0.0
    %380 = vmatpush1.msra.mxu0 0.0
    %381 = vmatprep.subr.mxu0 0.0
    %382 = vmatpush1.msra.mxu0 0.0
    %383 = vmatprep.subr.mxu0 0.0
    %384 = vmatpush1.msra.mxu0 0.0
    %385 = vmatprep.subr.mxu0 0.0
    %386 = vmatpush1.msra.mxu0 0.0
    %387 = vmatprep.subr.mxu0 0.0
    %388 = vmatpush1.msra.mxu0 0.0
    %389 = vmatprep.subr.mxu0 0.0
    %390 = vmatpush1.msra.mxu0 0.0
    %391 = vmatprep.subr.mxu0 0.0
    %392 = vmatpush1.msra.mxu0 0.0
    %393 = vmatprep.mubr.f32.mxu0 0.0
    %394 = vmatmul.mubr.f32.gmra.mrb[0].mxu0 %v323
    %v395 = vpop.f32.mrb[0].mxu0
    %v396 = vadd.f32 0.0, %v395
    %v397 = vpop.f32.mrb[0].mxu0
    %398 = vdwg.mxu0
    %v399 = vxor.u32 %v396, 2147483648
    %v400 = vmul.f32 %v399, 1.442695
    %v401 = vpow.pop %v400
    %v402 = vadd.f32 %v401, 1.0
    %v403 = vrcp.pop %v402
    %v404 = vmul.f32 1.0, %v403
    %v405 = vlaneseq
    %v406 = vshrl.u32 %v405, 7
    %v407 = vsub.s32 0, %v406
    %v408 = vrot.slane %v404, %v407
    %410 = vbcast.lane.b32.xlu0 %v408, 256
    %v411 = vpop.permute.xlu0 %410
    %s413 = sor.u32 256, 8
    %414 = vbcast.lane.b32.xlu0 %v408, %s413
    %v415 = vpop.permute.xlu0 %414
    %s417 = sor.u32 256, 16
    %418 = vbcast.lane.b32.xlu0 %v408, %s417
    %v419 = vpop.permute.xlu0 %418
    %s421 = sor.u32 256, 24
    %422 = vbcast.lane.b32.xlu0 %v408, %s421
    %v423 = vpop.permute.xlu0 %422
    %s425 = sor.u32 256, 32
    %426 = vbcast.lane.b32.xlu0 %v408, %s425
    %v427 = vpop.permute.xlu0 %426
    %s429 = sor.u32 256, 40
    %430 = vbcast.lane.b32.xlu0 %v408, %s429
    %v431 = vpop.permute.xlu0 %430
    %s433 = sor.u32 256, 48
    %434 = vbcast.lane.b32.xlu0 %v408, %s433
    %v435 = vpop.permute.xlu0 %434
    %s437 = sor.u32 256, 56
    %438 = vbcast.lane.b32.xlu0 %v408, %s437
    %v439 = vpop.permute.xlu0 %438
    %v440 = vlaneseq
    %v441 = vshrl.u32 %v440, 7
    %v442 = vsub.s32 1, %v441
    %v443 = vrot.slane %v404, %v442
    %445 = vbcast.lane.b32.xlu0 %v443, 256
    %v446 = vpop.permute.xlu0 %445
    %s448 = sor.u32 256, 8
    %449 = vbcast.lane.b32.xlu0 %v443, %s448
    %v450 = vpop.permute.xlu0 %449
    %s452 = sor.u32 256, 16
    %453 = vbcast.lane.b32.xlu0 %v443, %s452
    %v454 = vpop.permute.xlu0 %453
    %s456 = sor.u32 256, 24
    %457 = vbcast.lane.b32.xlu0 %v443, %s456
    %v458 = vpop.permute.xlu0 %457
    %s460 = sor.u32 256, 32
    %461 = vbcast.lane.b32.xlu0 %v443, %s460
    %v462 = vpop.permute.xlu0 %461
    %s464 = sor.u32 256, 40
    %465 = vbcast.lane.b32.xlu0 %v443, %s464
    %v466 = vpop.permute.xlu0 %465
    %s468 = sor.u32 256, 48
    %469 = vbcast.lane.b32.xlu0 %v443, %s468
    %v470 = vpop.permute.xlu0 %469
    %s472 = sor.u32 256, 56
    %473 = vbcast.lane.b32.xlu0 %v443, %s472
    %v474 = vpop.permute.xlu0 %473
    %v475 = vmul.f32 %v29, %v411
    %v476 = vmul.f32 %v30, %v411
    %v477 = vmul.f32 %v31, %v415
    %v478 = vmul.f32 %v32, %v415
    %v479 = vmul.f32 %v33, %v419
    %v480 = vmul.f32 %v34, %v419
    %v481 = vmul.f32 %v35, %v423
    %v482 = vmul.f32 %v36, %v423
    %v483 = vmul.f32 %v37, %v427
    %v484 = vmul.f32 %v38, %v427
    %v485 = vmul.f32 %v39, %v431
    %v486 = vmul.f32 %v40, %v431
    %v487 = vmul.f32 %v41, %v435
    %v488 = vmul.f32 %v42, %v435
    %v489 = vmul.f32 %v43, %v439
    %v490 = vmul.f32 %v44, %v439
    %v491 = vmul.f32 %v45, %v446
    %v492 = vmul.f32 %v46, %v446
    %v493 = vmul.f32 %v47, %v450
    %v494 = vmul.f32 %v48, %v450
    %v495 = vmul.f32 %v49, %v454
    %v496 = vmul.f32 %v50, %v454
    %v497 = vmul.f32 %v51, %v458
    %v498 = vmul.f32 %v52, %v458
    %v499 = vmul.f32 %v53, %v462
    %v500 = vmul.f32 %v54, %v462
    %v501 = vmul.f32 %v55, %v466
    %v502 = vmul.f32 %v56, %v466
    %v503 = vmul.f32 %v57, %v470
    %v504 = vmul.f32 %v58, %v470
    %v505 = vmul.f32 %v59, %v474
    %v506 = vmul.f32 %v60, %v474
    %507 = vst [vmem:[#allocation5] sm:$0xff] %v475
    %508 = vst [vmem:[#allocation5 + $0x8] sm:$0xff] %v476
    %509 = vst [vmem:[#allocation5 + $0x10] sm:$0xff] %v477
    %510 = vst [vmem:[#allocation5 + $0x18] sm:$0xff] %v478
    %511 = vst [vmem:[#allocation5 + $0x20] sm:$0xff] %v479
    %512 = vst [vmem:[#allocation5 + $0x28] sm:$0xff] %v480
    %513 = vst [vmem:[#allocation5 + $0x30] sm:$0xff] %v481
    %514 = vst [vmem:[#allocation5 + $0x38] sm:$0xff] %v482
    %515 = vst [vmem:[#allocation5 + $0x40] sm:$0xff] %v483
    %516 = vst [vmem:[#allocation5 + $0x48] sm:$0xff] %v484
    %517 = vst [vmem:[#allocation5 + $0x50] sm:$0xff] %v485
    %518 = vst [vmem:[#allocation5 + $0x58] sm:$0xff] %v486
    %519 = vst [vmem:[#allocation5 + $0x60] sm:$0xff] %v487
    %520 = vst [vmem:[#allocation5 + $0x68] sm:$0xff] %v488
    %521 = vst [vmem:[#allocation5 + $0x70] sm:$0xff] %v489
    %522 = vst [vmem:[#allocation5 + $0x78] sm:$0xff] %v490
    %523 = vst [vmem:[#allocation5 + $0x80] sm:$0xff] %v491
    %524 = vst [vmem:[#allocation5 + $0x88] sm:$0xff] %v492
    %525 = vst [vmem:[#allocation5 + $0x90] sm:$0xff] %v493
    %526 = vst [vmem:[#allocation5 + $0x98] sm:$0xff] %v494
    %527 = vst [vmem:[#allocation5 + $0xa0] sm:$0xff] %v495
    %528 = vst [vmem:[#allocation5 + $0xa8] sm:$0xff] %v496
    %529 = vst [vmem:[#allocation5 + $0xb0] sm:$0xff] %v497
    %530 = vst [vmem:[#allocation5 + $0xb8] sm:$0xff] %v498
    %531 = vst [vmem:[#allocation5 + $0xc0] sm:$0xff] %v499
    %532 = vst [vmem:[#allocation5 + $0xc8] sm:$0xff] %v500
    %533 = vst [vmem:[#allocation5 + $0xd0] sm:$0xff] %v501
    %534 = vst [vmem:[#allocation5 + $0xd8] sm:$0xff] %v502
    %535 = vst [vmem:[#allocation5 + $0xe0] sm:$0xff] %v503
    %536 = vst [vmem:[#allocation5 + $0xe8] sm:$0xff] %v504
    %537 = vst [vmem:[#allocation5 + $0xf0] sm:$0xff] %v505
    %538 = vst [vmem:[#allocation5 + $0xf8] sm:$0xff] %v506
    // Predicated region
    $region18: #{tpu_custom_call.1} parent=1 // pred_check
      _
    $region19: #{tpu_custom_call.1} parent=1 // pred_check_branch
      %540 = sbr.rel (0) target = $region21
    $region20: #{tpu_custom_call.1} parent=1 // pred_region
      %s542 = ssub.s32 4096, 4096
      %543 = vsyncadd [#allocation4], %s542
      %s544 = sshll.u32 [#allocation5], 4
      %s545 = int_to_ptr.vmem [resolvable:$true] %s544
      %550 = dma.vmem_to_hbm [thread:$0]  %s545, 4096, %s3, [#allocation4], 256, 256, 16
    $region21: #{tpu_custom_call.1} parent=1 // pred_fallthru
      _
    // Predicated region
    $region22: #{tpu_custom_call.1} parent=1 // pred_check
      _
    $region23: #{tpu_custom_call.1} parent=1 // pred_check_branch
      %552 = sbr.rel (0) target = $region25
    $region24: #{tpu_custom_call.1} parent=1 // pred_region
      %553 = dma.done [#allocation4], 4096
    $region25: #{tpu_custom_call.1} parent=1 // pred_fallthru
      _
    %554 = vsyncpa [#allocation3], 1
    %555 = vsyncpa [#allocation4], 1

</llo_original>
